<compile_context>
chip_gen: v7x
topology: tpu7x:2x2x1
jax: 0.10.0
libtpu: 0.0.40
codegen_flags: <defaults>
</compile_context>

<pallas_src>
import functools

import jax
import jax.numpy as jnp
from jax import lax
from jax.experimental import pallas as pl
from jax.experimental.pallas import tpu as pltpu

LEAK = 0.1
CHANNELS = 1
_VMEM_LIMIT = 32 * 1024 * 1024   # explicit: v5e default is only 16 MiB scoped
_TILE_CAP = 512                  # rows per M tile; safe for v7x's 64 MiB VMEM at dim=64


# -------------------------- spectral norm (param prep) --------------------------

def l2normalize(v, eps=1e-12):
    return v / (jnp.linalg.norm(v) + eps)


def spectral_normalize(w, u, v):
    """Matches SpectralNorm._update_u_v with power_iterations=1."""
    height = w.shape[0]
    w_flat = w.reshape(height, -1)
    v = l2normalize(w_flat.T @ u)
    u = l2normalize(w_flat @ v)
    sigma = u @ (w_flat @ v)
    return w / sigma


# ------------------------------ im2col glue (host) ------------------------------

def _round_up(x, m):
    return (x + m - 1) // m * m


def _pick_tile(M, cap=_TILE_CAP):
    # Multiple of 128 keeps the transposed head output lane-dense and the sublane
    # dim 8-aligned; the cap bounds per-block VMEM across generations.
    return cap if M >= cap else _round_up(M, 128)


def _im2col(x, KH, KW, stride, padding):
    """x: (B, H, W, Cin) -> slab (M, KH*KW*Cin), row order (b, ho, wo)."""
    if padding:
        x = jnp.pad(x, ((0, 0), (padding, padding), (padding, padding), (0, 0)))
    B, H, W, Cin = x.shape
    Ho = (H - KH) // stride + 1
    Wo = (W - KW) // stride + 1
    cols = []
    for i in range(KH):
        for j in range(KW):
            sl = x[:, i:i + stride * Ho:stride, j:j + stride * Wo:stride, :]
            cols.append(sl.reshape(B * Ho * Wo, Cin))
    slab = jnp.concatenate(cols, axis=1)   # (M, KH*KW*Cin), col order ((i*KW+j)*Cin + c)
    return slab, B, Ho, Wo


# ------------------------------ Pallas conv kernels ------------------------------

def _conv_gemm_kernel(x_ref, w_ref, b_ref, o_ref, *, apply_act):
    """Single whole-K MXU pass per M tile; bias + LeakyReLU fused epilogue."""
    y = jnp.dot(x_ref[...], w_ref[...], preferred_element_type=jnp.float32)
    y = y + b_ref[...]                       # (TM, Cout) + (1, Cout)
    if apply_act:
        y = jnp.where(y >= 0, y, LEAK * y)   # LeakyReLU(0.1)
    o_ref[...] = y.astype(o_ref.dtype)


def _conv_head_kernel(x_ref, w1_ref, b1_ref, w2_ref, b2_ref, o_ref):
    """Fused 3x3 conv (+bias+LeakyReLU) followed by a single-channel 1x1 head.

    The head output is emitted transposed as (1, TM) so M sits on the lane axis
    (lane-dense store instead of a Cout=1 masked store)."""
    h = jnp.dot(x_ref[...], w1_ref[...], preferred_element_type=jnp.float32)
    h = h + b1_ref[...]
    h = jnp.where(h >= 0, h, LEAK * h)
    # (1, C2) contracted against (TM, C2) on the channel axis -> (1, TM).
    p = lax.dot_general(w2_ref[...], h,
                        dimension_numbers=(((1,), (1,)), ((), ())),
                        preferred_element_type=jnp.float32)
    o_ref[...] = (p + b2_ref[...]).astype(o_ref.dtype)


def conv2d_pallas(x, weight, bias, *, stride=1, padding=0, apply_act=True):
    """x: (B, H, W, Cin) f32 NHWC.  weight: (Cout, Cin, KH, KW) (torch layout)."""
    Cout, Cin, KH, KW = weight.shape
    slab, B, Ho, Wo = _im2col(x, KH, KW, stride, padding)
    M, CK = slab.shape
    TM = _pick_tile(M)
    M_pad = _round_up(M, TM)
    if M_pad != M:
        slab = jnp.pad(slab, ((0, M_pad - M), (0, 0)))

    w_mat = jnp.transpose(weight, (2, 3, 1, 0)).reshape(CK, Cout)
    b_mat = bias.reshape(1, Cout).astype(jnp.float32)

    kernel = functools.partial(_conv_gemm_kernel, apply_act=apply_act)
    out = pl.pallas_call(
        kernel,
        out_shape=jax.ShapeDtypeStruct((M_pad, Cout), jnp.float32),
        grid_spec=pltpu.PrefetchScalarGridSpec(
            num_scalar_prefetch=0,
            grid=(M_pad // TM,),
            in_specs=[
                pl.BlockSpec((TM, CK), lambda i: (i, 0)),
                pl.BlockSpec((CK, Cout), lambda i: (0, 0)),
                pl.BlockSpec((1, Cout), lambda i: (0, 0)),
            ],
            out_specs=pl.BlockSpec((TM, Cout), lambda i: (i, 0)),
        ),
        compiler_params=pltpu.CompilerParams(
            dimension_semantics=("parallel",),
            vmem_limit_bytes=_VMEM_LIMIT),
    )(slab, w_mat, b_mat)
    return out[:M].reshape(B, Ho, Wo, Cout)


def conv2d_head_pallas(x, w1, b1, w2, b2, *, stride=1, padding=0):
    """Fused: KxK conv + bias + LeakyReLU, then 1x1 single-channel head conv.

    Returns a (B, Ho, Wo) single-channel head map."""
    C2, Cin, KH, KW = w1.shape
    assert w2.shape == (1, C2, 1, 1), "fused head expects a single-channel 1x1 conv"
    slab, B, Ho, Wo = _im2col(x, KH, KW, stride, padding)
    M, CK = slab.shape
    TM = _pick_tile(M)
    M_pad = _round_up(M, TM)
    if M_pad != M:
        slab = jnp.pad(slab, ((0, M_pad - M), (0, 0)))

    w1_mat = jnp.transpose(w1, (2, 3, 1, 0)).reshape(CK, C2)
    b1_mat = b1.reshape(1, C2).astype(jnp.float32)
    w2_mat = w2.reshape(1, C2).astype(jnp.float32)
    b2_mat = b2.reshape(1, 1).astype(jnp.float32)

    out = pl.pallas_call(
        _conv_head_kernel,
        out_shape=jax.ShapeDtypeStruct((1, M_pad), jnp.float32),
        grid_spec=pltpu.PrefetchScalarGridSpec(
            num_scalar_prefetch=0,
            grid=(M_pad // TM,),
            in_specs=[
                pl.BlockSpec((TM, CK), lambda i: (i, 0)),
                pl.BlockSpec((CK, C2), lambda i: (0, 0)),
                pl.BlockSpec((1, C2), lambda i: (0, 0)),
                pl.BlockSpec((1, C2), lambda i: (0, 0)),
                pl.BlockSpec((1, 1), lambda i: (0, 0)),
            ],
            out_specs=pl.BlockSpec((1, TM), lambda i: (0, i)),
        ),
        compiler_params=pltpu.CompilerParams(
            dimension_semantics=("parallel",),
            vmem_limit_bytes=_VMEM_LIMIT),
    )(slab, w1_mat, b1_mat, w2_mat, b2_mat)
    return out[0, :M].reshape(B, Ho, Wo)


# ------------------------------- model definition -------------------------------

def init_params(key, dim=8):
    def conv_p(k, cout, cin, kh, kw, scale=0.1):
        k1, k2, k3, k4 = jax.random.split(k, 4)
        return dict(
            w=scale * jax.random.normal(k1, (cout, cin, kh, kw), jnp.float32),
            b=scale * jax.random.normal(k2, (cout,), jnp.float32),
            u=l2normalize(jax.random.normal(k3, (cout,), jnp.float32)),
            v=l2normalize(jax.random.normal(k4, (cin * kh * kw,), jnp.float32)),
        )

    keys = jax.random.split(key, 8)
    D = dim
    return dict(
        conv1=conv_p(keys[0], D, CHANNELS, 3, 3),          # convs1[0]
        conv2=conv_p(keys[1], D, D, 4, 4),                 # convs1: stride-2
        conv3=conv_p(keys[2], 2 * D, D, 3, 3),             # convs1: -> 2*dim
        conv4=conv_p(keys[3], 2 * D, 2 * D, 4, 4),         # convs2: stride-2
        conv5=conv_p(keys[4], 4 * D, 2 * D, 3, 3),         # convs2: -> 4*dim
        final_med=conv_p(keys[5], 1, 4 * D, 1, 1),
        final_high_a=conv_p(keys[6], 2 * D, 2 * D, 3, 3),
        final_high_b=conv_p(keys[7], 1, 2 * D, 1, 1),
    )


def two_scale_discriminator_forward(params, x_nchw):
    x = jnp.transpose(x_nchw, (0, 2, 3, 1)).astype(jnp.float32)   # NCHW -> NHWC
    B = x.shape[0]

    def sn_w(p):
        return spectral_normalize(p['w'], p['u'], p['v'])

    # convs1 (Dropout2d -> identity in eval)
    h = conv2d_pallas(x, sn_w(params['conv1']), params['conv1']['b'],
                      stride=1, padding=1)
    h = conv2d_pallas(h, sn_w(params['conv2']), params['conv2']['b'],
                      stride=2, padding=0)
    m = conv2d_pallas(h, sn_w(params['conv3']), params['conv3']['b'],
                      stride=1, padding=0)
    # convs2
    h = conv2d_pallas(m, sn_w(params['conv4']), params['conv4']['b'],
                      stride=2, padding=0)
    # conv5 (+ bias + LeakyReLU) fused with finalMed's 1x1 head: with
    # global_pool=False, mL feeds only the med head, so it never hits HBM.
    pM = conv2d_head_pallas(h, sn_w(params['conv5']), params['conv5']['b'],
                            sn_w(params['final_med']), params['final_med']['b'],
                            stride=1, padding=0)
    # finalHigh: 3x3 (+ bias + LeakyReLU) fused with its 1x1 head.
    pH = conv2d_head_pallas(m, sn_w(params['final_high_a']), params['final_high_a']['b'],
                            sn_w(params['final_high_b']), params['final_high_b']['b'],
                            stride=1, padding=0)

    # Heads are single-channel, so NHWC flatten order == torch's NCHW .view(B, -1).
    return jnp.concatenate([pM.reshape(B, -1), pH.reshape(B, -1)], axis=1)


# ------------------------------ pure-JAX reference ------------------------------

def _conv_ref(x, w, b, stride, padding, act):
    y = lax.conv_general_dilated(
        x, jnp.transpose(w, (2, 3, 1, 0)),
        window_strides=(stride, stride),
        padding=[(padding, padding), (padding, padding)],
        dimension_numbers=('NHWC', 'HWIO', 'NHWC'),
        precision=lax.Precision.HIGHEST)
    y = y + b.reshape(1, 1, 1, -1)
    if act:
        y = jnp.where(y >= 0, y, LEAK * y)
    return y


def reference_forward(params, x_nchw):
    x = jnp.transpose(x_nchw, (0, 2, 3, 1)).astype(jnp.float32)
    B = x.shape[0]

    def sn_conv(h, p, stride=1, padding=0, act=True):
        w = spectral_normalize(p['w'], p['u'], p['v'])
        return _conv_ref(h, w, p['b'], stride, padding, act)

    h = sn_conv(x, params['conv1'], 1, 1, True)
    h = sn_conv(h, params['conv2'], 2, 0, True)
    m = sn_conv(h, params['conv3'], 1, 0, True)
    h = sn_conv(m, params['conv4'], 2, 0, True)
    mL = sn_conv(h, params['conv5'], 1, 0, True)
    pM = sn_conv(mL, params['final_med'], 1, 0, False)
    h = sn_conv(m, params['final_high_a'], 1, 0, True)
    pH = sn_conv(h, params['final_high_b'], 1, 0, False)
    return jnp.concatenate([pM.reshape(B, -1), pH.reshape(B, -1)], axis=1)


# ------------------------------------ main ------------------------------------

if __name__ == "__main__":
    key = jax.random.PRNGKey(0)
    kp, kx = jax.random.split(key)

    dim = 8           # small dim for the synthetic test (module default is 64)
    B, H, W = 2, 32, 32
    params = init_params(kp, dim=dim)
    x = jax.random.normal(kx, (B, CHANNELS, H, W), jnp.float32)   # torch-style NCHW

    out = two_scale_discriminator_forward(params, x)
    out = jax.block_until_ready(out)

    # shape: pM -> (B, 3*3), pH -> (B, 11*11)  =>  (B, 130)
    assert out.shape == (B, 130), out.shape
    assert bool(jnp.isfinite(out).all())

    ref = reference_forward(params, x)
    rel_err = float(jnp.max(jnp.abs(out - ref)) / (jnp.max(jnp.abs(ref)) + 1e-6))
    assert rel_err < 2e-3, f"mismatch vs reference, rel_err={rel_err}"

    print("KERNEL_OK")
</pallas_src>

<mosaic_0001>
module attributes {stable_mosaic.version = 11 : i64} {
  func.func @_conv_gemm_kernel(%arg0: i32, %arg1: memref<512x9xf32, #tpu.memory_space<vmem>>, %arg2: memref<9x8xf32, #tpu.memory_space<vmem>>, %arg3: memref<1x8xf32, #tpu.memory_space<vmem>>, %arg4: memref<512x8xf32, #tpu.memory_space<vmem>>) attributes {dimension_semantics = [#tpu.dimension_semantics<parallel>], iteration_bounds = array<i64: 4>, scalar_prefetch = 0 : i64, scratch_operands = 0 : i64, tpu.core_type = #tpu.core_type<tc>, window_params = [{transform_indices = @transform_0, window_bounds = array<i64: 512, 9>}, {pipeline_mode = #tpu.pipeline_mode<synchronous>, transform_indices = @transform_1, window_bounds = array<i64: 9, 8>}, {pipeline_mode = #tpu.pipeline_mode<synchronous>, transform_indices = @transform_2, window_bounds = array<i64: 1, 8>}, {transform_indices = @transform_3, window_bounds = array<i64: 512, 8>}]} {
    %c0 = arith.constant 0 : index
    %c0_0 = arith.constant 0 : index
    %0 = vector.load %arg1[%c0, %c0_0] : memref<512x9xf32, #tpu.memory_space<vmem>>, vector<512x9xf32>
    %c0_1 = arith.constant 0 : index
    %c0_2 = arith.constant 0 : index
    %1 = vector.load %arg2[%c0_1, %c0_2] : memref<9x8xf32, #tpu.memory_space<vmem>>, vector<9x8xf32>
    %cst = arith.constant dense<0.000000e+00> : vector<512x8xf32>
    %2 = tpu.matmul %0, %1, %cst {dimension_numbers = #tpu.dot_dimension_numbers<[1], [0], [0], [1], [0, 0, 1, 1], [], []>} : vector<512x9xf32>, vector<9x8xf32>, vector<512x8xf32> -> vector<512x8xf32>
    %c0_3 = arith.constant 0 : index
    %c0_4 = arith.constant 0 : index
    %3 = vector.load %arg3[%c0_3, %c0_4] : memref<1x8xf32, #tpu.memory_space<vmem>>, vector<1x8xf32>
    %4 = vector.broadcast %3 : vector<1x8xf32> to vector<512x8xf32>
    %5 = arith.addf %2, %4 : vector<512x8xf32>
    %cst_5 = arith.constant 0.000000e+00 : f32
    %6 = vector.broadcast %cst_5 : f32 to vector<512x8xf32>
    %7 = arith.cmpf oge, %5, %6 : vector<512x8xf32>
    %cst_6 = arith.constant 1.000000e-01 : f32
    %8 = vector.broadcast %cst_6 : f32 to vector<512x8xf32>
    %9 = arith.mulf %8, %5 : vector<512x8xf32>
    %10 = arith.select %7, %5, %9 : vector<512x8xi1>, vector<512x8xf32>
    %c0_7 = arith.constant 0 : index
    %c0_8 = arith.constant 0 : index
    %11 = vector.load %arg4[%c0_7, %c0_8] : memref<512x8xf32, #tpu.memory_space<vmem>>, vector<512x8xf32>
    tpu.vector_store %arg4[%c0_7, %c0_8], %10 {strides = array<i32>} : memref<512x8xf32, #tpu.memory_space<vmem>>, vector<512x8xf32>,
    return
  }
  func.func @transform_0(%arg0: i32) -> (i32, i32) {
    %c0_i32 = arith.constant 0 : i32
    %c0_i32_0 = arith.constant 0 : i32
    return %arg0, %c0_i32 : i32, i32
  }
  func.func @transform_1(%arg0: i32) -> (i32, i32) {
    %c0_i32 = arith.constant 0 : i32
    %c0_i32_0 = arith.constant 0 : i32
    %c0_i32_1 = arith.constant 0 : i32
    return %c0_i32, %c0_i32_0 : i32, i32
  }
  func.func @transform_2(%arg0: i32) -> (i32, i32) {
    %c0_i32 = arith.constant 0 : i32
    %c0_i32_0 = arith.constant 0 : i32
    %c0_i32_1 = arith.constant 0 : i32
    return %c0_i32, %c0_i32_0 : i32, i32
  }
  func.func @transform_3(%arg0: i32) -> (i32, i32) {
    %c0_i32 = arith.constant 0 : i32
    %c0_i32_0 = arith.constant 0 : i32
    return %arg0, %c0_i32 : i32, i32
  }
}

</mosaic_0001>

<llo_original>
// kernel: tpu_custom_call.1
$region0: #{tpu_custom_call.1}
  #allocation0 [shape = 'u32[]', space=smem, size = 0x4, offset = 0x4, fixed_abs, tag = 'smem constant byte address 0x4 - core index']
  #allocation1 [shape = 'u32[144,128]{1,0:T(1,128)}', space=vmem, size = 0x12000, scoped, tag = 'internal scratch']
  %s0 = inlined_call_operand.vmem [shape: f32[2048,9], index: 0, kind: input, shape index: {}]
  %s1 = inlined_call_operand.vmem [shape: f32[9,8], index: 1, kind: input, shape index: {}]
  %s2 = inlined_call_operand.vmem [shape: f32[1,8], index: 2, kind: input, shape index: {}]
  %s3 = inlined_call_operand.vmem [shape: f32[2048,8], index: 3, kind: output, shape index: {}]
  %s4 = sld [smem:[#allocation0]]
  $region45: #{tpu_custom_call.1} parent=0
    _
  %s6 = ssub.s32 1, %s4
  %s7 = scalar_select 0, %s6, %s4
  loop: start=0, step=1, limit=6
  $region2: #{tpu_custom_call.1} parent=0 // loop_pre_header
    _
  $region3: #{tpu_custom_call.1} parent=0 // loop_header
    %s9 = sphi 0, %s13
    %p10 = scmp.ge.s32.totalorder %s9, 6
    %s19 = sphi 0, %s21
    %s22 = sphi 0, %s19
    %s23 = sphi 0, %s22
    %s39 = sphi 0, %s23
    %s43 = sphi 0, %s43
    %s45 = sphi 0, %s43
    %s46 = sphi 0, %s45
    %s60 = sphi 0, %s46
    %s64 = sphi 0, %s64
    %s66 = sphi 0, %s64
    %s67 = sphi 0, %s66
    %s81 = sphi 0, %s67
    %s87 = sphi 0, %s89
    %s90 = sphi 0, %s87
    %s91 = sphi 0, %s90
    %s107 = sphi 0, %s91
  $region4: #{tpu_custom_call.1} parent=0 // loop_header_branch
    %12 = sbr.rel (%p10) target = $region8
  $region5: #{tpu_custom_call.1} parent=0 // loop_body
    %s14 = ssub.s32 %s9, 1
    %s15 = ssub.s32 %s9, 2
    %s16 = sadd.s32 %s9, 1
    %s17 = ssub.s32 %s9, %s16
    %p18 = scmp.eq.s32.totalorder %s17, 0
    %s20 = sadd.s32 %s19, 1
    %s21 = scalar_select %p18, %s19, %s20
    %p24 = pneg %p18
    %p25 = scmp.eq.s32.totalorder %s9, 3
    %p26 = por %p24, %p25
    %p27 = scmp.ne.s32.totalorder %s19, %s22
    %p28 = scmp.eq.s32.totalorder %s9, 0
    %p29 = por %p27, %p28
    %p30 = scmp.ne.s32.totalorder %s19, %s22
    %p31 = scmp.eq.s32.totalorder %s14, 3
    %p32 = por %p30, %p31
    %p33 = scmp.ne.s32.totalorder %s22, %s23
    %p34 = scmp.eq.s32.totalorder %s14, 0
    %p35 = por %p33, %p34
    %p36 = scmp.ne.s32.totalorder %s22, %s23
    %p37 = scmp.eq.s32.totalorder %s15, 3
    %p38 = por %p36, %p37
    %p40 = scmp.ne.s32.totalorder %s23, %s39
    %p41 = scmp.eq.s32.totalorder %s15, 0
    %p42 = por %p40, %p41
    %s44 = sadd.s32 %s43, 1
    %p47 = scmp.eq.s32.totalorder %s9, 3
    %p48 = scmp.ne.s32.totalorder %s43, %s45
    %p49 = scmp.eq.s32.totalorder %s9, 0
    %p50 = por %p48, %p49
    %p51 = scmp.ne.s32.totalorder %s43, %s45
    %p52 = scmp.eq.s32.totalorder %s14, 3
    %p53 = por %p51, %p52
    %p54 = scmp.ne.s32.totalorder %s45, %s46
    %p55 = scmp.eq.s32.totalorder %s14, 0
    %p56 = por %p54, %p55
    %p57 = scmp.ne.s32.totalorder %s45, %s46
    %p58 = scmp.eq.s32.totalorder %s15, 3
    %p59 = por %p57, %p58
    %p61 = scmp.ne.s32.totalorder %s46, %s60
    %p62 = scmp.eq.s32.totalorder %s15, 0
    %p63 = por %p61, %p62
    %s65 = sadd.s32 %s64, 1
    %p68 = scmp.eq.s32.totalorder %s9, 3
    %p69 = scmp.ne.s32.totalorder %s64, %s66
    %p70 = scmp.eq.s32.totalorder %s9, 0
    %p71 = por %p69, %p70
    %p72 = scmp.ne.s32.totalorder %s64, %s66
    %p73 = scmp.eq.s32.totalorder %s14, 3
    %p74 = por %p72, %p73
    %p75 = scmp.ne.s32.totalorder %s66, %s67
    %p76 = scmp.eq.s32.totalorder %s14, 0
    %p77 = por %p75, %p76
    %p78 = scmp.ne.s32.totalorder %s66, %s67
    %p79 = scmp.eq.s32.totalorder %s15, 3
    %p80 = por %p78, %p79
    %p82 = scmp.ne.s32.totalorder %s67, %s81
    %p83 = scmp.eq.s32.totalorder %s15, 0
    %p84 = por %p82, %p83
    %s85 = ssub.s32 %s9, %s16
    %p86 = scmp.eq.s32.totalorder %s85, 0
    %s88 = sadd.s32 %s87, 1
    %s89 = scalar_select %p86, %s87, %s88
    %p92 = pneg %p86
    %p93 = scmp.eq.s32.totalorder %s9, 3
    %p94 = por %p92, %p93
    %p95 = scmp.ne.s32.totalorder %s87, %s90
    %p96 = scmp.eq.s32.totalorder %s9, 0
    %p97 = por %p95, %p96
    %p98 = scmp.ne.s32.totalorder %s87, %s90
    %p99 = scmp.eq.s32.totalorder %s14, 3
    %p100 = por %p98, %p99
    %p101 = scmp.ne.s32.totalorder %s90, %s91
    %p102 = scmp.eq.s32.totalorder %s14, 0
    %p103 = por %p101, %p102
    %p104 = scmp.ne.s32.totalorder %s90, %s91
    %p105 = scmp.eq.s32.totalorder %s15, 3
    %p106 = por %p104, %p105
    %p108 = scmp.ne.s32.totalorder %s91, %s107
    %p109 = scmp.eq.s32.totalorder %s15, 0
    %p110 = por %p108, %p109
    %p111 = scmp.le.s32.totalorder 1, %s9
    %p112 = scmp.lt.s32.totalorder %s9, 5
    %p113 = pnand %p111, %p112
    %p114 = pneg %p113
    // Predicated region
    $region9: #{tpu_custom_call.1} parent=5 // pred_check
      _
    $region10: #{tpu_custom_call.1} parent=5 // pred_check_branch
      %116 = sbr.rel (%p113) target = $region12
    $region11: #{tpu_custom_call.1} parent=5 // pred_region
      %s117 = ssub.s32 %s9, 1
      // Predicated region
      $region13: #{tpu_custom_call.1} parent=11 // pred_check
        %p118 = pneg %p56
      $region14: #{tpu_custom_call.1} parent=11 // pred_check_branch
        %120 = sbr.rel (%p118) target = $region16
      $region15: #{tpu_custom_call.1} parent=11 // pred_region
        _
      $region16: #{tpu_custom_call.1} parent=11 // pred_fallthru
        _
      // Predicated region
      $region17: #{tpu_custom_call.1} parent=11 // pred_check
        %p121 = pneg %p77
      $region18: #{tpu_custom_call.1} parent=11 // pred_check_branch
        %123 = sbr.rel (%p121) target = $region20
      $region19: #{tpu_custom_call.1} parent=11 // pred_region
        _
      $region20: #{tpu_custom_call.1} parent=11 // pred_fallthru
        _
    $region12: #{tpu_custom_call.1} parent=5 // pred_fallthru
      _
    %p124 = scmp.lt.s32.totalorder %s9, 4
    // Predicated region
    $region21: #{tpu_custom_call.1} parent=5 // pred_check
      %p125 = pneg %p124
    $region22: #{tpu_custom_call.1} parent=5 // pred_check_branch
      %127 = sbr.rel (%p125) target = $region24
    $region23: #{tpu_custom_call.1} parent=5 // pred_region
      // Predicated region
      $region25: #{tpu_custom_call.1} parent=23 // pred_check
        %p128 = pneg %p29
      $region26: #{tpu_custom_call.1} parent=23 // pred_check_branch
        %130 = sbr.rel (%p128) target = $region28
      $region27: #{tpu_custom_call.1} parent=23 // pred_region
        %s131 = smul.u32 64, %s9
        %p132 = scmp.lt.s32.totalorder %s131, 255
        %s133 = scalar_select %p132, %s131, 255
        %s134 = smul.addr %s133, 8
        %s135 = scalar_lea.vmem %s0, %s134
        %s136 = smul.u32 64, %s9
      $region28: #{tpu_custom_call.1} parent=23 // pred_fallthru
        _
    $region24: #{tpu_custom_call.1} parent=5 // pred_fallthru
      _
    %p137 = scmp.le.s32.totalorder 1, %s9
    %p138 = scmp.lt.s32.totalorder %s9, 5
    %p139 = pnand %p137, %p138
    %p140 = pneg %p139
    // Predicated region
    $region29: #{tpu_custom_call.1} parent=5 // pred_check
      _
    $region30: #{tpu_custom_call.1} parent=5 // pred_check_branch
      %142 = sbr.rel (%p139) target = $region32
    $region31: #{tpu_custom_call.1} parent=5 // pred_region
      %s143 = ssub.s32 %s9, 1
      %s144 = smul.u32 64, %s14
      %p145 = scmp.lt.s32.totalorder %s144, 255
      %s146 = scalar_select %p145, %s144, 255
      %s147 = smul.addr %s146, 8
      %s148 = scalar_lea.vmem %s0, %s147
      %p149 = pneg %p35
      %p150 = pneg %p32
      %p151 = pneg %p56
      %p152 = pneg %p53
      %p153 = pneg %p77
      %p154 = pneg %p74
      %p155 = pneg %p103
      %p156 = pneg %p100
      %s157 = smul.u32 64, %s14
      %p158 = scmp.lt.s32.totalorder %s157, 255
      %s159 = scalar_select %p158, %s157, 255
      %s160 = smul.addr %s159, 8
      %s161 = scalar_lea.vmem %s3, %s160
      %s162 = smul.u32 64, %s14
      %p163 = scmp.lt.s32.totalorder %s162, 255
      %s164 = scalar_select %p163, %s162, 255
      %s165 = smul.addr %s164, 8
      %s166 = scalar_lea.vmem %s0, %s165
      %s167 = smul.u32 64, %s14
      %s168 = smul.u32 64, %s14
      %p169 = scmp.lt.s32.totalorder %s168, 255
      %s170 = scalar_select %p169, %s168, 255
      %s171 = smul.addr %s170, 8
      %s172 = scalar_lea.vmem %s3, %s171
      %s173 = smul.u32 64, %s14
      %v174 = vld [vmem:[%s166] sm:$0xff]
      %v175 = vld [vmem:[%s166 + $0x8] sm:$0xff]
      %v176 = vld [vmem:[%s166 + $0x10] sm:$0xff]
      %v177 = vld [vmem:[%s166 + $0x18] sm:$0xff]
      %v178 = vld [vmem:[%s166 + $0x20] sm:$0xff]
      %v179 = vld [vmem:[%s166 + $0x28] sm:$0xff]
      %v180 = vld [vmem:[%s166 + $0x30] sm:$0xff]
      %v181 = vld [vmem:[%s166 + $0x38] sm:$0xff]
      %v182 = vld [vmem:[%s166 + $0x40] sm:$0xff]
      %v183 = vld [vmem:[%s166 + $0x48] sm:$0xff]
      %v184 = vld [vmem:[%s166 + $0x50] sm:$0xff]
      %v185 = vld [vmem:[%s166 + $0x58] sm:$0xff]
      %v186 = vld [vmem:[%s166 + $0x60] sm:$0xff]
      %v187 = vld [vmem:[%s166 + $0x68] sm:$0xff]
      %v188 = vld [vmem:[%s166 + $0x70] sm:$0xff]
      %v189 = vld [vmem:[%s166 + $0x78] sm:$0xff]
      %v190 = vld [vmem:[%s166 + $0x80] sm:$0xff]
      %v191 = vld [vmem:[%s166 + $0x88] sm:$0xff]
      %v192 = vld [vmem:[%s166 + $0x90] sm:$0xff]
      %v193 = vld [vmem:[%s166 + $0x98] sm:$0xff]
      %v194 = vld [vmem:[%s166 + $0xa0] sm:$0xff]
      %v195 = vld [vmem:[%s166 + $0xa8] sm:$0xff]
      %v196 = vld [vmem:[%s166 + $0xb0] sm:$0xff]
      %v197 = vld [vmem:[%s166 + $0xb8] sm:$0xff]
      %v198 = vld [vmem:[%s166 + $0xc0] sm:$0xff]
      %v199 = vld [vmem:[%s166 + $0xc8] sm:$0xff]
      %v200 = vld [vmem:[%s166 + $0xd0] sm:$0xff]
      %v201 = vld [vmem:[%s166 + $0xd8] sm:$0xff]
      %v202 = vld [vmem:[%s166 + $0xe0] sm:$0xff]
      %v203 = vld [vmem:[%s166 + $0xe8] sm:$0xff]
      %v204 = vld [vmem:[%s166 + $0xf0] sm:$0xff]
      %v205 = vld [vmem:[%s166 + $0xf8] sm:$0xff]
      %v206 = vld [vmem:[%s166 + $0x100] sm:$0xff]
      %v207 = vld [vmem:[%s166 + $0x108] sm:$0xff]
      %v208 = vld [vmem:[%s166 + $0x110] sm:$0xff]
      %v209 = vld [vmem:[%s166 + $0x118] sm:$0xff]
      %v210 = vld [vmem:[%s166 + $0x120] sm:$0xff]
      %v211 = vld [vmem:[%s166 + $0x128] sm:$0xff]
      %v212 = vld [vmem:[%s166 + $0x130] sm:$0xff]
      %v213 = vld [vmem:[%s166 + $0x138] sm:$0xff]
      %v214 = vld [vmem:[%s166 + $0x140] sm:$0xff]
      %v215 = vld [vmem:[%s166 + $0x148] sm:$0xff]
      %v216 = vld [vmem:[%s166 + $0x150] sm:$0xff]
      %v217 = vld [vmem:[%s166 + $0x158] sm:$0xff]
      %v218 = vld [vmem:[%s166 + $0x160] sm:$0xff]
      %v219 = vld [vmem:[%s166 + $0x168] sm:$0xff]
      %v220 = vld [vmem:[%s166 + $0x170] sm:$0xff]
      %v221 = vld [vmem:[%s166 + $0x178] sm:$0xff]
      %v222 = vld [vmem:[%s166 + $0x180] sm:$0xff]
      %v223 = vld [vmem:[%s166 + $0x188] sm:$0xff]
      %v224 = vld [vmem:[%s166 + $0x190] sm:$0xff]
      %v225 = vld [vmem:[%s166 + $0x198] sm:$0xff]
      %v226 = vld [vmem:[%s166 + $0x1a0] sm:$0xff]
      %v227 = vld [vmem:[%s166 + $0x1a8] sm:$0xff]
      %v228 = vld [vmem:[%s166 + $0x1b0] sm:$0xff]
      %v229 = vld [vmem:[%s166 + $0x1b8] sm:$0xff]
      %v230 = vld [vmem:[%s166 + $0x1c0] sm:$0xff]
      %v231 = vld [vmem:[%s166 + $0x1c8] sm:$0xff]
      %v232 = vld [vmem:[%s166 + $0x1d0] sm:$0xff]
      %v233 = vld [vmem:[%s166 + $0x1d8] sm:$0xff]
      %v234 = vld [vmem:[%s166 + $0x1e0] sm:$0xff]
      %v235 = vld [vmem:[%s166 + $0x1e8] sm:$0xff]
      %v236 = vld [vmem:[%s166 + $0x1f0] sm:$0xff]
      %v237 = vld [vmem:[%s166 + $0x1f8] sm:$0xff]
      %v238 = vld [vmem:[%s1] sm:$0xff]
      %v239 = vld [vmem:[%s1 + $0x8] sm:$0x1]
      %v240 = vld [vmem:[%s2] sm:$0x1]
      %v242 = vlaneseq
      %v243 = vshrl.u32 %v242, 7
      %v244 = vsub.s32 0, %v243
      %v245 = vrot.slane %v240, %v244
      %vm247 = vcmask 72704
      %v249 = vsel %vm247, %v174, 0
      %v252 = vsel %vm247, %v175, 0
      %v255 = vsel %vm247, %v176, 0
      %v258 = vsel %vm247, %v177, 0
      %v261 = vsel %vm247, %v178, 0
      %v264 = vsel %vm247, %v179, 0
      %v267 = vsel %vm247, %v180, 0
      %v270 = vsel %vm247, %v181, 0
      %v273 = vsel %vm247, %v182, 0
      %v276 = vsel %vm247, %v183, 0
      %v279 = vsel %vm247, %v184, 0
      %v282 = vsel %vm247, %v185, 0
      %v285 = vsel %vm247, %v186, 0
      %v288 = vsel %vm247, %v187, 0
      %v291 = vsel %vm247, %v188, 0
      %v294 = vsel %vm247, %v189, 0
      %v297 = vsel %vm247, %v190, 0
      %v300 = vsel %vm247, %v191, 0
      %v303 = vsel %vm247, %v192, 0
      %v306 = vsel %vm247, %v193, 0
      %v309 = vsel %vm247, %v194, 0
      %v312 = vsel %vm247, %v195, 0
      %v315 = vsel %vm247, %v196, 0
      %v318 = vsel %vm247, %v197, 0
      %v321 = vsel %vm247, %v198, 0
      %v324 = vsel %vm247, %v199, 0
      %v327 = vsel %vm247, %v200, 0
      %v330 = vsel %vm247, %v201, 0
      %v333 = vsel %vm247, %v202, 0
      %v336 = vsel %vm247, %v203, 0
      %v339 = vsel %vm247, %v204, 0
      %v342 = vsel %vm247, %v205, 0
      %v345 = vsel %vm247, %v206, 0
      %v348 = vsel %vm247, %v207, 0
      %v351 = vsel %vm247, %v208, 0
      %v354 = vsel %vm247, %v209, 0
      %v357 = vsel %vm247, %v210, 0
      %v360 = vsel %vm247, %v211, 0
      %v363 = vsel %vm247, %v212, 0
      %v366 = vsel %vm247, %v213, 0
      %v369 = vsel %vm247, %v214, 0
      %v372 = vsel %vm247, %v215, 0
      %v375 = vsel %vm247, %v216, 0
      %v378 = vsel %vm247, %v217, 0
      %v381 = vsel %vm247, %v218, 0
      %v384 = vsel %vm247, %v219, 0
      %v387 = vsel %vm247, %v220, 0
      %v390 = vsel %vm247, %v221, 0
      %v393 = vsel %vm247, %v222, 0
      %v396 = vsel %vm247, %v223, 0
      %v399 = vsel %vm247, %v224, 0
      %v402 = vsel %vm247, %v225, 0
      %v405 = vsel %vm247, %v226, 0
      %v408 = vsel %vm247, %v227, 0
      %v411 = vsel %vm247, %v228, 0
      %v414 = vsel %vm247, %v229, 0
      %v417 = vsel %vm247, %v230, 0
      %v420 = vsel %vm247, %v231, 0
      %v423 = vsel %vm247, %v232, 0
      %v426 = vsel %vm247, %v233, 0
      %v429 = vsel %vm247, %v234, 0
      %v432 = vsel %vm247, %v235, 0
      %v435 = vsel %vm247, %v236, 0
      %v438 = vsel %vm247, %v237, 0
      %vm440 = vcmask 1040384
      %v442 = vsel %vm440, %v239, 0
      %444 = vmatprep.subr.mxu0 0.0
      %445 = vmatpush1.msra.mxu0 %v238
      %446 = vmatprep.subr.mxu0 0.0
      %447 = vmatpush1.msra.mxu0 %v442
      %448 = vmatprep.subr.mxu0 0.0
      %449 = vmatpush1.msra.mxu0 0.0
      %450 = vmatprep.subr.mxu0 0.0
      %451 = vmatpush1.msra.mxu0 0.0
      %452 = vmatprep.subr.mxu0 0.0
      %453 = vmatpush1.msra.mxu0 0.0
      %454 = vmatprep.subr.mxu0 0.0
      %455 = vmatpush1.msra.mxu0 0.0
      %456 = vmatprep.subr.mxu0 0.0
      %457 = vmatpush1.msra.mxu0 0.0
      %458 = vmatprep.subr.mxu0 0.0
      %459 = vmatpush1.msra.mxu0 0.0
      %460 = vmatprep.subr.mxu0 0.0
      %461 = vmatpush1.msra.mxu0 0.0
      %462 = vmatprep.subr.mxu0 0.0
      %463 = vmatpush1.msra.mxu0 0.0
      %464 = vmatprep.subr.mxu0 0.0
      %465 = vmatpush1.msra.mxu0 0.0
      %466 = vmatprep.subr.mxu0 0.0
      %467 = vmatpush1.msra.mxu0 0.0
      %468 = vmatprep.subr.mxu0 0.0
      %469 = vmatpush1.msra.mxu0 0.0
      %470 = vmatprep.subr.mxu0 0.0
      %471 = vmatpush1.msra.mxu0 0.0
      %472 = vmatprep.subr.mxu0 0.0
      %473 = vmatpush1.msra.mxu0 0.0
      %474 = vmatprep.subr.mxu0 0.0
      %475 = vmatpush1.msra.mxu0 0.0
      %476 = vmatprep.subr.mxu0 0.0
      %477 = vmatpush1.msra.mxu0 0.0
      %478 = vmatprep.subr.mxu0 0.0
      %479 = vmatpush1.msra.mxu0 0.0
      %480 = vmatprep.subr.mxu0 0.0
      %481 = vmatpush1.msra.mxu0 0.0
      %482 = vmatprep.subr.mxu0 0.0
      %483 = vmatpush1.msra.mxu0 0.0
      %484 = vmatprep.subr.mxu0 0.0
      %485 = vmatpush1.msra.mxu0 0.0
      %486 = vmatprep.subr.mxu0 0.0
      %487 = vmatpush1.msra.mxu0 0.0
      %488 = vmatprep.subr.mxu0 0.0
      %489 = vmatpush1.msra.mxu0 0.0
      %490 = vmatprep.subr.mxu0 0.0
      %491 = vmatpush1.msra.mxu0 0.0
      %492 = vmatprep.subr.mxu0 0.0
      %493 = vmatpush1.msra.mxu0 0.0
      %494 = vmatprep.subr.mxu0 0.0
      %495 = vmatpush1.msra.mxu0 0.0
      %496 = vmatprep.subr.mxu0 0.0
      %497 = vmatpush1.msra.mxu0 0.0
      %498 = vmatprep.subr.mxu0 0.0
      %499 = vmatpush1.msra.mxu0 0.0
      %500 = vmatprep.subr.mxu0 0.0
      %501 = vmatpush1.msra.mxu0 0.0
      %502 = vmatprep.subr.mxu0 0.0
      %503 = vmatpush1.msra.mxu0 0.0
      %504 = vmatprep.subr.mxu0 0.0
      %505 = vmatpush1.msra.mxu0 0.0
      %506 = vmatprep.subr.mxu0 0.0
      %507 = vmatpush1.msra.mxu0 0.0
      %508 = vmatprep.mubr.f32.mxu0 0.0
      %509 = vmatmul.mubr.f32.gmra.mrb[0].mxu0 %v249
      %v510 = vpop.f32.mrb[0].mxu0
      %v511 = vadd.f32 %v245, %v510
      %v512 = vpop.f32.mrb[0].mxu0
      %513 = vmatprep.mubr.f32.mxu0 0.0
      %514 = vmatmul.mubr.f32.gmra.mrb[0].mxu0 %v252
      %v515 = vpop.f32.mrb[0].mxu0
      %v516 = vadd.f32 %v245, %v515
      %v517 = vpop.f32.mrb[0].mxu0
      %518 = vmatprep.mubr.f32.mxu0 0.0
      %519 = vmatmul.mubr.f32.gmra.mrb[0].mxu0 %v255
      %v520 = vpop.f32.mrb[0].mxu0
      %v521 = vadd.f32 %v245, %v520
      %v522 = vpop.f32.mrb[0].mxu0
      %523 = vmatprep.mubr.f32.mxu0 0.0
      %524 = vmatmul.mubr.f32.gmra.mrb[0].mxu0 %v258
      %v525 = vpop.f32.mrb[0].mxu0
      %v526 = vadd.f32 %v245, %v525
      %v527 = vpop.f32.mrb[0].mxu0
      %528 = vmatprep.mubr.f32.mxu0 0.0
      %529 = vmatmul.mubr.f32.gmra.mrb[0].mxu0 %v261
      %v530 = vpop.f32.mrb[0].mxu0
      %v531 = vadd.f32 %v245, %v530
      %v532 = vpop.f32.mrb[0].mxu0
      %533 = vmatprep.mubr.f32.mxu0 0.0
      %534 = vmatmul.mubr.f32.gmra.mrb[0].mxu0 %v264
      %v535 = vpop.f32.mrb[0].mxu0
      %v536 = vadd.f32 %v245, %v535
      %v537 = vpop.f32.mrb[0].mxu0
      %538 = vmatprep.mubr.f32.mxu0 0.0
      %539 = vmatmul.mubr.f32.gmra.mrb[0].mxu0 %v267
      %v540 = vpop.f32.mrb[0].mxu0
      %v541 = vadd.f32 %v245, %v540
      %v542 = vpop.f32.mrb[0].mxu0
      %543 = vmatprep.mubr.f32.mxu0 0.0
      %544 = vmatmul.mubr.f32.gmra.mrb[0].mxu0 %v270
      %v545 = vpop.f32.mrb[0].mxu0
      %v546 = vadd.f32 %v245, %v545
      %v547 = vpop.f32.mrb[0].mxu0
      %548 = vmatprep.mubr.f32.mxu0 0.0
      %549 = vmatmul.mubr.f32.gmra.mrb[0].mxu0 %v273
      %v550 = vpop.f32.mrb[0].mxu0
      %v551 = vadd.f32 %v245, %v550
      %v552 = vpop.f32.mrb[0].mxu0
      %553 = vmatprep.mubr.f32.mxu0 0.0
      %554 = vmatmul.mubr.f32.gmra.mrb[0].mxu0 %v276
      %v555 = vpop.f32.mrb[0].mxu0
      %v556 = vadd.f32 %v245, %v555
      %v557 = vpop.f32.mrb[0].mxu0
      %558 = vmatprep.mubr.f32.mxu0 0.0
      %559 = vmatmul.mubr.f32.gmra.mrb[0].mxu0 %v279
      %v560 = vpop.f32.mrb[0].mxu0
      %v561 = vadd.f32 %v245, %v560
      %v562 = vpop.f32.mrb[0].mxu0
      %563 = vmatprep.mubr.f32.mxu0 0.0
      %564 = vmatmul.mubr.f32.gmra.mrb[0].mxu0 %v282
      %v565 = vpop.f32.mrb[0].mxu0
      %v566 = vadd.f32 %v245, %v565
      %v567 = vpop.f32.mrb[0].mxu0
      %568 = vmatprep.mubr.f32.mxu0 0.0
      %569 = vmatmul.mubr.f32.gmra.mrb[0].mxu0 %v285
      %v570 = vpop.f32.mrb[0].mxu0
      %v571 = vadd.f32 %v245, %v570
      %v572 = vpop.f32.mrb[0].mxu0
      %573 = vmatprep.mubr.f32.mxu0 0.0
      %574 = vmatmul.mubr.f32.gmra.mrb[0].mxu0 %v288
      %v575 = vpop.f32.mrb[0].mxu0
      %v576 = vadd.f32 %v245, %v575
      %v577 = vpop.f32.mrb[0].mxu0
      %578 = vmatprep.mubr.f32.mxu0 0.0
      %579 = vmatmul.mubr.f32.gmra.mrb[0].mxu0 %v291
      %v580 = vpop.f32.mrb[0].mxu0
      %v581 = vadd.f32 %v245, %v580
      %v582 = vpop.f32.mrb[0].mxu0
      %583 = vmatprep.mubr.f32.mxu0 0.0
      %584 = vmatmul.mubr.f32.gmra.mrb[0].mxu0 %v294
      %v585 = vpop.f32.mrb[0].mxu0
      %v586 = vadd.f32 %v245, %v585
      %v587 = vpop.f32.mrb[0].mxu0
      %588 = vmatprep.mubr.f32.mxu0 0.0
      %589 = vmatmul.mubr.f32.gmra.mrb[0].mxu0 %v297
      %v590 = vpop.f32.mrb[0].mxu0
      %v591 = vadd.f32 %v245, %v590
      %v592 = vpop.f32.mrb[0].mxu0
      %593 = vmatprep.mubr.f32.mxu0 0.0
      %594 = vmatmul.mubr.f32.gmra.mrb[0].mxu0 %v300
      %v595 = vpop.f32.mrb[0].mxu0
      %v596 = vadd.f32 %v245, %v595
      %v597 = vpop.f32.mrb[0].mxu0
      %598 = vmatprep.mubr.f32.mxu0 0.0
      %599 = vmatmul.mubr.f32.gmra.mrb[0].mxu0 %v303
      %v600 = vpop.f32.mrb[0].mxu0
      %v601 = vadd.f32 %v245, %v600
      %v602 = vpop.f32.mrb[0].mxu0
      %603 = vmatprep.mubr.f32.mxu0 0.0
      %604 = vmatmul.mubr.f32.gmra.mrb[0].mxu0 %v306
      %v605 = vpop.f32.mrb[0].mxu0
      %v606 = vadd.f32 %v245, %v605
      %v607 = vpop.f32.mrb[0].mxu0
      %608 = vmatprep.mubr.f32.mxu0 0.0
      %609 = vmatmul.mubr.f32.gmra.mrb[0].mxu0 %v309
      %v610 = vpop.f32.mrb[0].mxu0
      %v611 = vadd.f32 %v245, %v610
      %v612 = vpop.f32.mrb[0].mxu0
      %613 = vmatprep.mubr.f32.mxu0 0.0
      %614 = vmatmul.mubr.f32.gmra.mrb[0].mxu0 %v312
      %v615 = vpop.f32.mrb[0].mxu0
      %v616 = vadd.f32 %v245, %v615
      %v617 = vpop.f32.mrb[0].mxu0
      %618 = vmatprep.mubr.f32.mxu0 0.0
      %619 = vmatmul.mubr.f32.gmra.mrb[0].mxu0 %v315
      %v620 = vpop.f32.mrb[0].mxu0
      %v621 = vadd.f32 %v245, %v620
      %v622 = vpop.f32.mrb[0].mxu0
      %623 = vmatprep.mubr.f32.mxu0 0.0
      %624 = vmatmul.mubr.f32.gmra.mrb[0].mxu0 %v318
      %v625 = vpop.f32.mrb[0].mxu0
      %v626 = vadd.f32 %v245, %v625
      %v627 = vpop.f32.mrb[0].mxu0
      %628 = vmatprep.mubr.f32.mxu0 0.0
      %629 = vmatmul.mubr.f32.gmra.mrb[0].mxu0 %v321
      %v630 = vpop.f32.mrb[0].mxu0
      %v631 = vadd.f32 %v245, %v630
      %v632 = vpop.f32.mrb[0].mxu0
      %633 = vmatprep.mubr.f32.mxu0 0.0
      %634 = vmatmul.mubr.f32.gmra.mrb[0].mxu0 %v324
      %v635 = vpop.f32.mrb[0].mxu0
      %v636 = vadd.f32 %v245, %v635
      %v637 = vpop.f32.mrb[0].mxu0
      %638 = vmatprep.mubr.f32.mxu0 0.0
      %639 = vmatmul.mubr.f32.gmra.mrb[0].mxu0 %v327
      %v640 = vpop.f32.mrb[0].mxu0
      %v641 = vadd.f32 %v245, %v640
      %v642 = vpop.f32.mrb[0].mxu0
      %643 = vmatprep.mubr.f32.mxu0 0.0
      %644 = vmatmul.mubr.f32.gmra.mrb[0].mxu0 %v330
      %v645 = vpop.f32.mrb[0].mxu0
      %v646 = vadd.f32 %v245, %v645
      %v647 = vpop.f32.mrb[0].mxu0
      %648 = vmatprep.mubr.f32.mxu0 0.0
      %649 = vmatmul.mubr.f32.gmra.mrb[0].mxu0 %v333
      %v650 = vpop.f32.mrb[0].mxu0
      %v651 = vadd.f32 %v245, %v650
      %v652 = vpop.f32.mrb[0].mxu0
      %653 = vmatprep.mubr.f32.mxu0 0.0
      %654 = vmatmul.mubr.f32.gmra.mrb[0].mxu0 %v336
      %v655 = vpop.f32.mrb[0].mxu0
      %v656 = vadd.f32 %v245, %v655
      %v657 = vpop.f32.mrb[0].mxu0
      %658 = vmatprep.mubr.f32.mxu0 0.0
      %659 = vmatmul.mubr.f32.gmra.mrb[0].mxu0 %v339
      %v660 = vpop.f32.mrb[0].mxu0
      %v661 = vadd.f32 %v245, %v660
      %v662 = vpop.f32.mrb[0].mxu0
      %663 = vmatprep.mubr.f32.mxu0 0.0
      %664 = vmatmul.mubr.f32.gmra.mrb[0].mxu0 %v342
      %v665 = vpop.f32.mrb[0].mxu0
      %v666 = vadd.f32 %v245, %v665
      %v667 = vpop.f32.mrb[0].mxu0
      %668 = vmatprep.mubr.f32.mxu0 0.0
      %669 = vmatmul.mubr.f32.gmra.mrb[0].mxu0 %v345
      %v670 = vpop.f32.mrb[0].mxu0
      %v671 = vadd.f32 %v245, %v670
      %v672 = vpop.f32.mrb[0].mxu0
      %673 = vmatprep.mubr.f32.mxu0 0.0
      %674 = vmatmul.mubr.f32.gmra.mrb[0].mxu0 %v348
      %v675 = vpop.f32.mrb[0].mxu0
      %v676 = vadd.f32 %v245, %v675
      %v677 = vpop.f32.mrb[0].mxu0
      %678 = vmatprep.mubr.f32.mxu0 0.0
      %679 = vmatmul.mubr.f32.gmra.mrb[0].mxu0 %v351
      %v680 = vpop.f32.mrb[0].mxu0
      %v681 = vadd.f32 %v245, %v680
      %v682 = vpop.f32.mrb[0].mxu0
      %683 = vmatprep.mubr.f32.mxu0 0.0
      %684 = vmatmul.mubr.f32.gmra.mrb[0].mxu0 %v354
      %v685 = vpop.f32.mrb[0].mxu0
      %v686 = vadd.f32 %v245, %v685
      %v687 = vpop.f32.mrb[0].mxu0
      %688 = vmatprep.mubr.f32.mxu0 0.0
      %689 = vmatmul.mubr.f32.gmra.mrb[0].mxu0 %v357
      %v690 = vpop.f32.mrb[0].mxu0
      %v691 = vadd.f32 %v245, %v690
      %v692 = vpop.f32.mrb[0].mxu0
      %693 = vmatprep.mubr.f32.mxu0 0.0
      %694 = vmatmul.mubr.f32.gmra.mrb[0].mxu0 %v360
      %v695 = vpop.f32.mrb[0].mxu0
      %v696 = vadd.f32 %v245, %v695
      %v697 = vpop.f32.mrb[0].mxu0
      %698 = vmatprep.mubr.f32.mxu0 0.0
      %699 = vmatmul.mubr.f32.gmra.mrb[0].mxu0 %v363
      %v700 = vpop.f32.mrb[0].mxu0
      %v701 = vadd.f32 %v245, %v700
      %v702 = vpop.f32.mrb[0].mxu0
      %703 = vmatprep.mubr.f32.mxu0 0.0
      %704 = vmatmul.mubr.f32.gmra.mrb[0].mxu0 %v366
      %v705 = vpop.f32.mrb[0].mxu0
      %v706 = vadd.f32 %v245, %v705
      %v707 = vpop.f32.mrb[0].mxu0
      %708 = vmatprep.mubr.f32.mxu0 0.0
      %709 = vmatmul.mubr.f32.gmra.mrb[0].mxu0 %v369
      %v710 = vpop.f32.mrb[0].mxu0
      %v711 = vadd.f32 %v245, %v710
      %v712 = vpop.f32.mrb[0].mxu0
      %713 = vmatprep.mubr.f32.mxu0 0.0
      %714 = vmatmul.mubr.f32.gmra.mrb[0].mxu0 %v372
      %v715 = vpop.f32.mrb[0].mxu0
      %v716 = vadd.f32 %v245, %v715
      %v717 = vpop.f32.mrb[0].mxu0
      %718 = vmatprep.mubr.f32.mxu0 0.0
      %719 = vmatmul.mubr.f32.gmra.mrb[0].mxu0 %v375
      %v720 = vpop.f32.mrb[0].mxu0
      %v721 = vadd.f32 %v245, %v720
      %v722 = vpop.f32.mrb[0].mxu0
      %723 = vmatprep.mubr.f32.mxu0 0.0
      %724 = vmatmul.mubr.f32.gmra.mrb[0].mxu0 %v378
      %v725 = vpop.f32.mrb[0].mxu0
      %v726 = vadd.f32 %v245, %v725
      %v727 = vpop.f32.mrb[0].mxu0
      %728 = vmatprep.mubr.f32.mxu0 0.0
      %729 = vmatmul.mubr.f32.gmra.mrb[0].mxu0 %v381
      %v730 = vpop.f32.mrb[0].mxu0
      %v731 = vadd.f32 %v245, %v730
      %v732 = vpop.f32.mrb[0].mxu0
      %733 = vmatprep.mubr.f32.mxu0 0.0
      %734 = vmatmul.mubr.f32.gmra.mrb[0].mxu0 %v384
      %v735 = vpop.f32.mrb[0].mxu0
      %v736 = vadd.f32 %v245, %v735
      %v737 = vpop.f32.mrb[0].mxu0
      %738 = vmatprep.mubr.f32.mxu0 0.0
      %739 = vmatmul.mubr.f32.gmra.mrb[0].mxu0 %v387
      %v740 = vpop.f32.mrb[0].mxu0
      %v741 = vadd.f32 %v245, %v740
      %v742 = vpop.f32.mrb[0].mxu0
      %743 = vmatprep.mubr.f32.mxu0 0.0
      %744 = vmatmul.mubr.f32.gmra.mrb[0].mxu0 %v390
      %v745 = vpop.f32.mrb[0].mxu0
      %v746 = vadd.f32 %v245, %v745
      %v747 = vpop.f32.mrb[0].mxu0
      %748 = vmatprep.mubr.f32.mxu0 0.0
      %749 = vmatmul.mubr.f32.gmra.mrb[0].mxu0 %v393
      %v750 = vpop.f32.mrb[0].mxu0
      %v751 = vadd.f32 %v245, %v750
      %v752 = vpop.f32.mrb[0].mxu0
      %753 = vmatprep.mubr.f32.mxu0 0.0
      %754 = vmatmul.mubr.f32.gmra.mrb[0].mxu0 %v396
      %v755 = vpop.f32.mrb[0].mxu0
      %v756 = vadd.f32 %v245, %v755
      %v757 = vpop.f32.mrb[0].mxu0
      %758 = vmatprep.mubr.f32.mxu0 0.0
      %759 = vmatmul.mubr.f32.gmra.mrb[0].mxu0 %v399
      %v760 = vpop.f32.mrb[0].mxu0
      %v761 = vadd.f32 %v245, %v760
      %v762 = vpop.f32.mrb[0].mxu0
      %763 = vmatprep.mubr.f32.mxu0 0.0
      %764 = vmatmul.mubr.f32.gmra.mrb[0].mxu0 %v402
      %v765 = vpop.f32.mrb[0].mxu0
      %v766 = vadd.f32 %v245, %v765
      %v767 = vpop.f32.mrb[0].mxu0
      %768 = vmatprep.mubr.f32.mxu0 0.0
      %769 = vmatmul.mubr.f32.gmra.mrb[0].mxu0 %v405
      %v770 = vpop.f32.mrb[0].mxu0
      %v771 = vadd.f32 %v245, %v770
      %v772 = vpop.f32.mrb[0].mxu0
      %773 = vmatprep.mubr.f32.mxu0 0.0
      %774 = vmatmul.mubr.f32.gmra.mrb[0].mxu0 %v408
      %v775 = vpop.f32.mrb[0].mxu0
      %v776 = vadd.f32 %v245, %v775
      %v777 = vpop.f32.mrb[0].mxu0
      %778 = vmatprep.mubr.f32.mxu0 0.0
      %779 = vmatmul.mubr.f32.gmra.mrb[0].mxu0 %v411
      %v780 = vpop.f32.mrb[0].mxu0
      %v781 = vadd.f32 %v245, %v780
      %v782 = vpop.f32.mrb[0].mxu0
      %783 = vmatprep.mubr.f32.mxu0 0.0
      %784 = vmatmul.mubr.f32.gmra.mrb[0].mxu0 %v414
      %v785 = vpop.f32.mrb[0].mxu0
      %v786 = vadd.f32 %v245, %v785
      %v787 = vpop.f32.mrb[0].mxu0
      %788 = vmatprep.mubr.f32.mxu0 0.0
      %789 = vmatmul.mubr.f32.gmra.mrb[0].mxu0 %v417
      %v790 = vpop.f32.mrb[0].mxu0
      %v791 = vadd.f32 %v245, %v790
      %v792 = vpop.f32.mrb[0].mxu0
      %793 = vmatprep.mubr.f32.mxu0 0.0
      %794 = vmatmul.mubr.f32.gmra.mrb[0].mxu0 %v420
      %v795 = vpop.f32.mrb[0].mxu0
      %v796 = vadd.f32 %v245, %v795
      %v797 = vpop.f32.mrb[0].mxu0
      %798 = vmatprep.mubr.f32.mxu0 0.0
      %799 = vmatmul.mubr.f32.gmra.mrb[0].mxu0 %v423
      %v800 = vpop.f32.mrb[0].mxu0
      %v801 = vadd.f32 %v245, %v800
      %v802 = vpop.f32.mrb[0].mxu0
      %803 = vmatprep.mubr.f32.mxu0 0.0
      %804 = vmatmul.mubr.f32.gmra.mrb[0].mxu0 %v426
      %v805 = vpop.f32.mrb[0].mxu0
      %v806 = vadd.f32 %v245, %v805
      %v807 = vpop.f32.mrb[0].mxu0
      %808 = vmatprep.mubr.f32.mxu0 0.0
      %809 = vmatmul.mubr.f32.gmra.mrb[0].mxu0 %v429
      %v810 = vpop.f32.mrb[0].mxu0
      %v811 = vadd.f32 %v245, %v810
      %v812 = vpop.f32.mrb[0].mxu0
      %813 = vmatprep.mubr.f32.mxu0 0.0
      %814 = vmatmul.mubr.f32.gmra.mrb[0].mxu0 %v432
      %v815 = vpop.f32.mrb[0].mxu0
      %v816 = vadd.f32 %v245, %v815
      %v817 = vpop.f32.mrb[0].mxu0
      %818 = vmatprep.mubr.f32.mxu0 0.0
      %819 = vmatmul.mubr.f32.gmra.mrb[0].mxu0 %v435
      %v820 = vpop.f32.mrb[0].mxu0
      %v821 = vadd.f32 %v245, %v820
      %v822 = vpop.f32.mrb[0].mxu0
      %823 = vmatprep.mubr.f32.mxu0 0.0
      %824 = vmatmul.mubr.f32.gmra.mrb[0].mxu0 %v438
      %v825 = vpop.f32.mrb[0].mxu0
      %v826 = vadd.f32 %v245, %v825
      %v827 = vpop.f32.mrb[0].mxu0
      %828 = vdwg.mxu0
      %vm829 = vcmp.ge.f32.partialorder %v511, 0.0
      %vm830 = vcmp.ge.f32.partialorder %v516, 0.0
      %vm831 = vcmp.ge.f32.partialorder %v521, 0.0
      %vm832 = vcmp.ge.f32.partialorder %v526, 0.0
      %vm833 = vcmp.ge.f32.partialorder %v531, 0.0
      %vm834 = vcmp.ge.f32.partialorder %v536, 0.0
      %vm835 = vcmp.ge.f32.partialorder %v541, 0.0
      %vm836 = vcmp.ge.f32.partialorder %v546, 0.0
      %vm837 = vcmp.ge.f32.partialorder %v551, 0.0
      %vm838 = vcmp.ge.f32.partialorder %v556, 0.0
      %vm839 = vcmp.ge.f32.partialorder %v561, 0.0
      %vm840 = vcmp.ge.f32.partialorder %v566, 0.0
      %vm841 = vcmp.ge.f32.partialorder %v571, 0.0
      %vm842 = vcmp.ge.f32.partialorder %v576, 0.0
      %vm843 = vcmp.ge.f32.partialorder %v581, 0.0
      %vm844 = vcmp.ge.f32.partialorder %v586, 0.0
      %vm845 = vcmp.ge.f32.partialorder %v591, 0.0
      %vm846 = vcmp.ge.f32.partialorder %v596, 0.0
      %vm847 = vcmp.ge.f32.partialorder %v601, 0.0
      %vm848 = vcmp.ge.f32.partialorder %v606, 0.0
      %vm849 = vcmp.ge.f32.partialorder %v611, 0.0
      %vm850 = vcmp.ge.f32.partialorder %v616, 0.0
      %vm851 = vcmp.ge.f32.partialorder %v621, 0.0
      %vm852 = vcmp.ge.f32.partialorder %v626, 0.0
      %vm853 = vcmp.ge.f32.partialorder %v631, 0.0
      %vm854 = vcmp.ge.f32.partialorder %v636, 0.0
      %vm855 = vcmp.ge.f32.partialorder %v641, 0.0
      %vm856 = vcmp.ge.f32.partialorder %v646, 0.0
      %vm857 = vcmp.ge.f32.partialorder %v651, 0.0
      %vm858 = vcmp.ge.f32.partialorder %v656, 0.0
      %vm859 = vcmp.ge.f32.partialorder %v661, 0.0
      %vm860 = vcmp.ge.f32.partialorder %v666, 0.0
      %vm861 = vcmp.ge.f32.partialorder %v671, 0.0
      %vm862 = vcmp.ge.f32.partialorder %v676, 0.0
      %vm863 = vcmp.ge.f32.partialorder %v681, 0.0
      %vm864 = vcmp.ge.f32.partialorder %v686, 0.0
      %vm865 = vcmp.ge.f32.partialorder %v691, 0.0
      %vm866 = vcmp.ge.f32.partialorder %v696, 0.0
      %vm867 = vcmp.ge.f32.partialorder %v701, 0.0
      %vm868 = vcmp.ge.f32.partialorder %v706, 0.0
      %vm869 = vcmp.ge.f32.partialorder %v711, 0.0
      %vm870 = vcmp.ge.f32.partialorder %v716, 0.0
      %vm871 = vcmp.ge.f32.partialorder %v721, 0.0
      %vm872 = vcmp.ge.f32.partialorder %v726, 0.0
      %vm873 = vcmp.ge.f32.partialorder %v731, 0.0
      %vm874 = vcmp.ge.f32.partialorder %v736, 0.0
      %vm875 = vcmp.ge.f32.partialorder %v741, 0.0
      %vm876 = vcmp.ge.f32.partialorder %v746, 0.0
      %vm877 = vcmp.ge.f32.partialorder %v751, 0.0
      %vm878 = vcmp.ge.f32.partialorder %v756, 0.0
      %vm879 = vcmp.ge.f32.partialorder %v761, 0.0
      %vm880 = vcmp.ge.f32.partialorder %v766, 0.0
      %vm881 = vcmp.ge.f32.partialorder %v771, 0.0
      %vm882 = vcmp.ge.f32.partialorder %v776, 0.0
      %vm883 = vcmp.ge.f32.partialorder %v781, 0.0
      %vm884 = vcmp.ge.f32.partialorder %v786, 0.0
      %vm885 = vcmp.ge.f32.partialorder %v791, 0.0
      %vm886 = vcmp.ge.f32.partialorder %v796, 0.0
      %vm887 = vcmp.ge.f32.partialorder %v801, 0.0
      %vm888 = vcmp.ge.f32.partialorder %v806, 0.0
      %vm889 = vcmp.ge.f32.partialorder %v811, 0.0
      %vm890 = vcmp.ge.f32.partialorder %v816, 0.0
      %vm891 = vcmp.ge.f32.partialorder %v821, 0.0
      %vm892 = vcmp.ge.f32.partialorder %v826, 0.0
      %v893 = vmul.f32 %v511, 0.1
      %v894 = vmul.f32 %v516, 0.1
      %v895 = vmul.f32 %v521, 0.1
      %v896 = vmul.f32 %v526, 0.1
      %v897 = vmul.f32 %v531, 0.1
      %v898 = vmul.f32 %v536, 0.1
      %v899 = vmul.f32 %v541, 0.1
      %v900 = vmul.f32 %v546, 0.1
      %v901 = vmul.f32 %v551, 0.1
      %v902 = vmul.f32 %v556, 0.1
      %v903 = vmul.f32 %v561, 0.1
      %v904 = vmul.f32 %v566, 0.1
      %v905 = vmul.f32 %v571, 0.1
      %v906 = vmul.f32 %v576, 0.1
      %v907 = vmul.f32 %v581, 0.1
      %v908 = vmul.f32 %v586, 0.1
      %v909 = vmul.f32 %v591, 0.1
      %v910 = vmul.f32 %v596, 0.1
      %v911 = vmul.f32 %v601, 0.1
      %v912 = vmul.f32 %v606, 0.1
      %v913 = vmul.f32 %v611, 0.1
      %v914 = vmul.f32 %v616, 0.1
      %v915 = vmul.f32 %v621, 0.1
      %v916 = vmul.f32 %v626, 0.1
      %v917 = vmul.f32 %v631, 0.1
      %v918 = vmul.f32 %v636, 0.1
      %v919 = vmul.f32 %v641, 0.1
      %v920 = vmul.f32 %v646, 0.1
      %v921 = vmul.f32 %v651, 0.1
      %v922 = vmul.f32 %v656, 0.1
      %v923 = vmul.f32 %v661, 0.1
      %v924 = vmul.f32 %v666, 0.1
      %v925 = vmul.f32 %v671, 0.1
      %v926 = vmul.f32 %v676, 0.1
      %v927 = vmul.f32 %v681, 0.1
      %v928 = vmul.f32 %v686, 0.1
      %v929 = vmul.f32 %v691, 0.1
      %v930 = vmul.f32 %v696, 0.1
      %v931 = vmul.f32 %v701, 0.1
      %v932 = vmul.f32 %v706, 0.1
      %v933 = vmul.f32 %v711, 0.1
      %v934 = vmul.f32 %v716, 0.1
      %v935 = vmul.f32 %v721, 0.1
      %v936 = vmul.f32 %v726, 0.1
      %v937 = vmul.f32 %v731, 0.1
      %v938 = vmul.f32 %v736, 0.1
      %v939 = vmul.f32 %v741, 0.1
      %v940 = vmul.f32 %v746, 0.1
      %v941 = vmul.f32 %v751, 0.1
      %v942 = vmul.f32 %v756, 0.1
      %v943 = vmul.f32 %v761, 0.1
      %v944 = vmul.f32 %v766, 0.1
      %v945 = vmul.f32 %v771, 0.1
      %v946 = vmul.f32 %v776, 0.1
      %v947 = vmul.f32 %v781, 0.1
      %v948 = vmul.f32 %v786, 0.1
      %v949 = vmul.f32 %v791, 0.1
      %v950 = vmul.f32 %v796, 0.1
      %v951 = vmul.f32 %v801, 0.1
      %v952 = vmul.f32 %v806, 0.1
      %v953 = vmul.f32 %v811, 0.1
      %v954 = vmul.f32 %v816, 0.1
      %v955 = vmul.f32 %v821, 0.1
      %v956 = vmul.f32 %v826, 0.1
      %v957 = vsel %vm829, %v511, %v893
      %v958 = vsel %vm830, %v516, %v894
      %v959 = vsel %vm831, %v521, %v895
      %v960 = vsel %vm832, %v526, %v896
      %v961 = vsel %vm833, %v531, %v897
      %v962 = vsel %vm834, %v536, %v898
      %v963 = vsel %vm835, %v541, %v899
      %v964 = vsel %vm836, %v546, %v900
      %v965 = vsel %vm837, %v551, %v901
      %v966 = vsel %vm838, %v556, %v902
      %v967 = vsel %vm839, %v561, %v903
      %v968 = vsel %vm840, %v566, %v904
      %v969 = vsel %vm841, %v571, %v905
      %v970 = vsel %vm842, %v576, %v906
      %v971 = vsel %vm843, %v581, %v907
      %v972 = vsel %vm844, %v586, %v908
      %v973 = vsel %vm845, %v591, %v909
      %v974 = vsel %vm846, %v596, %v910
      %v975 = vsel %vm847, %v601, %v911
      %v976 = vsel %vm848, %v606, %v912
      %v977 = vsel %vm849, %v611, %v913
      %v978 = vsel %vm850, %v616, %v914
      %v979 = vsel %vm851, %v621, %v915
      %v980 = vsel %vm852, %v626, %v916
      %v981 = vsel %vm853, %v631, %v917
      %v982 = vsel %vm854, %v636, %v918
      %v983 = vsel %vm855, %v641, %v919
      %v984 = vsel %vm856, %v646, %v920
      %v985 = vsel %vm857, %v651, %v921
      %v986 = vsel %vm858, %v656, %v922
      %v987 = vsel %vm859, %v661, %v923
      %v988 = vsel %vm860, %v666, %v924
      %v989 = vsel %vm861, %v671, %v925
      %v990 = vsel %vm862, %v676, %v926
      %v991 = vsel %vm863, %v681, %v927
      %v992 = vsel %vm864, %v686, %v928
      %v993 = vsel %vm865, %v691, %v929
      %v994 = vsel %vm866, %v696, %v930
      %v995 = vsel %vm867, %v701, %v931
      %v996 = vsel %vm868, %v706, %v932
      %v997 = vsel %vm869, %v711, %v933
      %v998 = vsel %vm870, %v716, %v934
      %v999 = vsel %vm871, %v721, %v935
      %v1000 = vsel %vm872, %v726, %v936
      %v1001 = vsel %vm873, %v731, %v937
      %v1002 = vsel %vm874, %v736, %v938
      %v1003 = vsel %vm875, %v741, %v939
      %v1004 = vsel %vm876, %v746, %v940
      %v1005 = vsel %vm877, %v751, %v941
      %v1006 = vsel %vm878, %v756, %v942
      %v1007 = vsel %vm879, %v761, %v943
      %v1008 = vsel %vm880, %v766, %v944
      %v1009 = vsel %vm881, %v771, %v945
      %v1010 = vsel %vm882, %v776, %v946
      %v1011 = vsel %vm883, %v781, %v947
      %v1012 = vsel %vm884, %v786, %v948
      %v1013 = vsel %vm885, %v791, %v949
      %v1014 = vsel %vm886, %v796, %v950
      %v1015 = vsel %vm887, %v801, %v951
      %v1016 = vsel %vm888, %v806, %v952
      %v1017 = vsel %vm889, %v811, %v953
      %v1018 = vsel %vm890, %v816, %v954
      %v1019 = vsel %vm891, %v821, %v955
      %v1020 = vsel %vm892, %v826, %v956
      %vm1021 = vcmask 64512
      %1022 = vst.msk [vmem:[%s172] sm:$0xff] %vm1021, %v957
      %1023 = vst.msk [vmem:[%s172 + $0x8] sm:$0xff] %vm1021, %v958
      %1024 = vst.msk [vmem:[%s172 + $0x10] sm:$0xff] %vm1021, %v959
      %1025 = vst.msk [vmem:[%s172 + $0x18] sm:$0xff] %vm1021, %v960
      %1026 = vst.msk [vmem:[%s172 + $0x20] sm:$0xff] %vm1021, %v961
      %1027 = vst.msk [vmem:[%s172 + $0x28] sm:$0xff] %vm1021, %v962
      %1028 = vst.msk [vmem:[%s172 + $0x30] sm:$0xff] %vm1021, %v963
      %1029 = vst.msk [vmem:[%s172 + $0x38] sm:$0xff] %vm1021, %v964
      %1030 = vst.msk [vmem:[%s172 + $0x40] sm:$0xff] %vm1021, %v965
      %1031 = vst.msk [vmem:[%s172 + $0x48] sm:$0xff] %vm1021, %v966
      %1032 = vst.msk [vmem:[%s172 + $0x50] sm:$0xff] %vm1021, %v967
      %1033 = vst.msk [vmem:[%s172 + $0x58] sm:$0xff] %vm1021, %v968
      %1034 = vst.msk [vmem:[%s172 + $0x60] sm:$0xff] %vm1021, %v969
      %1035 = vst.msk [vmem:[%s172 + $0x68] sm:$0xff] %vm1021, %v970
      %1036 = vst.msk [vmem:[%s172 + $0x70] sm:$0xff] %vm1021, %v971
      %1037 = vst.msk [vmem:[%s172 + $0x78] sm:$0xff] %vm1021, %v972
      %1038 = vst.msk [vmem:[%s172 + $0x80] sm:$0xff] %vm1021, %v973
      %1039 = vst.msk [vmem:[%s172 + $0x88] sm:$0xff] %vm1021, %v974
      %1040 = vst.msk [vmem:[%s172 + $0x90] sm:$0xff] %vm1021, %v975
      %1041 = vst.msk [vmem:[%s172 + $0x98] sm:$0xff] %vm1021, %v976
      %1042 = vst.msk [vmem:[%s172 + $0xa0] sm:$0xff] %vm1021, %v977
      %1043 = vst.msk [vmem:[%s172 + $0xa8] sm:$0xff] %vm1021, %v978
      %1044 = vst.msk [vmem:[%s172 + $0xb0] sm:$0xff] %vm1021, %v979
      %1045 = vst.msk [vmem:[%s172 + $0xb8] sm:$0xff] %vm1021, %v980
      %1046 = vst.msk [vmem:[%s172 + $0xc0] sm:$0xff] %vm1021, %v981
      %1047 = vst.msk [vmem:[%s172 + $0xc8] sm:$0xff] %vm1021, %v982
      %1048 = vst.msk [vmem:[%s172 + $0xd0] sm:$0xff] %vm1021, %v983
      %1049 = vst.msk [vmem:[%s172 + $0xd8] sm:$0xff] %vm1021, %v984
      %1050 = vst.msk [vmem:[%s172 + $0xe0] sm:$0xff] %vm1021, %v985
      %1051 = vst.msk [vmem:[%s172 + $0xe8] sm:$0xff] %vm1021, %v986
      %1052 = vst.msk [vmem:[%s172 + $0xf0] sm:$0xff] %vm1021, %v987
      %1053 = vst.msk [vmem:[%s172 + $0xf8] sm:$0xff] %vm1021, %v988
      %1054 = vst.msk [vmem:[%s172 + $0x100] sm:$0xff] %vm1021, %v989
      %1055 = vst.msk [vmem:[%s172 + $0x108] sm:$0xff] %vm1021, %v990
      %1056 = vst.msk [vmem:[%s172 + $0x110] sm:$0xff] %vm1021, %v991
      %1057 = vst.msk [vmem:[%s172 + $0x118] sm:$0xff] %vm1021, %v992
      %1058 = vst.msk [vmem:[%s172 + $0x120] sm:$0xff] %vm1021, %v993
      %1059 = vst.msk [vmem:[%s172 + $0x128] sm:$0xff] %vm1021, %v994
      %1060 = vst.msk [vmem:[%s172 + $0x130] sm:$0xff] %vm1021, %v995
      %1061 = vst.msk [vmem:[%s172 + $0x138] sm:$0xff] %vm1021, %v996
      %1062 = vst.msk [vmem:[%s172 + $0x140] sm:$0xff] %vm1021, %v997
      %1063 = vst.msk [vmem:[%s172 + $0x148] sm:$0xff] %vm1021, %v998
      %1064 = vst.msk [vmem:[%s172 + $0x150] sm:$0xff] %vm1021, %v999
      %1065 = vst.msk [vmem:[%s172 + $0x158] sm:$0xff] %vm1021, %v1000
      %1066 = vst.msk [vmem:[%s172 + $0x160] sm:$0xff] %vm1021, %v1001
      %1067 = vst.msk [vmem:[%s172 + $0x168] sm:$0xff] %vm1021, %v1002
      %1068 = vst.msk [vmem:[%s172 + $0x170] sm:$0xff] %vm1021, %v1003
      %1069 = vst.msk [vmem:[%s172 + $0x178] sm:$0xff] %vm1021, %v1004
      %1070 = vst.msk [vmem:[%s172 + $0x180] sm:$0xff] %vm1021, %v1005
      %1071 = vst.msk [vmem:[%s172 + $0x188] sm:$0xff] %vm1021, %v1006
      %1072 = vst.msk [vmem:[%s172 + $0x190] sm:$0xff] %vm1021, %v1007
      %1073 = vst.msk [vmem:[%s172 + $0x198] sm:$0xff] %vm1021, %v1008
      %1074 = vst.msk [vmem:[%s172 + $0x1a0] sm:$0xff] %vm1021, %v1009
      %1075 = vst.msk [vmem:[%s172 + $0x1a8] sm:$0xff] %vm1021, %v1010
      %1076 = vst.msk [vmem:[%s172 + $0x1b0] sm:$0xff] %vm1021, %v1011
      %1077 = vst.msk [vmem:[%s172 + $0x1b8] sm:$0xff] %vm1021, %v1012
      %1078 = vst.msk [vmem:[%s172 + $0x1c0] sm:$0xff] %vm1021, %v1013
      %1079 = vst.msk [vmem:[%s172 + $0x1c8] sm:$0xff] %vm1021, %v1014
      %1080 = vst.msk [vmem:[%s172 + $0x1d0] sm:$0xff] %vm1021, %v1015
      %1081 = vst.msk [vmem:[%s172 + $0x1d8] sm:$0xff] %vm1021, %v1016
      %1082 = vst.msk [vmem:[%s172 + $0x1e0] sm:$0xff] %vm1021, %v1017
      %1083 = vst.msk [vmem:[%s172 + $0x1e8] sm:$0xff] %vm1021, %v1018
      %1084 = vst.msk [vmem:[%s172 + $0x1f0] sm:$0xff] %vm1021, %v1019
      %1085 = vst.msk [vmem:[%s172 + $0x1f8] sm:$0xff] %vm1021, %v1020
      %s1086 = smul.u32 64, %s14
      %p1087 = scmp.lt.s32.totalorder %s1086, 255
      %s1088 = scalar_select %p1087, %s1086, 255
      %s1089 = smul.addr %s1088, 8
      %s1090 = scalar_lea.vmem %s3, %s1089
      // Predicated region
      $region33: #{tpu_custom_call.1} parent=31 // pred_check
        %p1091 = pneg %p100
      $region34: #{tpu_custom_call.1} parent=31 // pred_check_branch
        %1093 = sbr.rel (%p1091) target = $region36
      $region35: #{tpu_custom_call.1} parent=31 // pred_region
        %s1094 = smul.u32 64, %s14
      $region36: #{tpu_custom_call.1} parent=31 // pred_fallthru
        _
    $region32: #{tpu_custom_call.1} parent=5 // pred_fallthru
      _
    %p1095 = scmp.le.s32.totalorder 2, %s9
    // Predicated region
    $region37: #{tpu_custom_call.1} parent=5 // pred_check
      %p1096 = pneg %p1095
    $region38: #{tpu_custom_call.1} parent=5 // pred_check_branch
      %1098 = sbr.rel (%p1096) target = $region40
    $region39: #{tpu_custom_call.1} parent=5 // pred_region
      %s1099 = ssub.s32 %s9, 2
      // Predicated region
      $region41: #{tpu_custom_call.1} parent=39 // pred_check
        %p1100 = pneg %p106
      $region42: #{tpu_custom_call.1} parent=39 // pred_check_branch
        %1102 = sbr.rel (%p1100) target = $region44
      $region43: #{tpu_custom_call.1} parent=39 // pred_region
        %s1103 = smul.u32 64, %s15
        %p1104 = scmp.lt.s32.totalorder %s1103, 255
        %s1105 = scalar_select %p1104, %s1103, 255
        %s1106 = smul.addr %s1105, 8
        %s1107 = scalar_lea.vmem %s3, %s1106
      $region44: #{tpu_custom_call.1} parent=39 // pred_fallthru
        _
    $region40: #{tpu_custom_call.1} parent=5 // pred_fallthru
      _
  $region6: #{tpu_custom_call.1} parent=0 // loop_footer
    %s13 = sadd.s32 1, %s9
  $region7: #{tpu_custom_call.1} parent=0 // loop_footer_branch
    %8 = sbr.rel target = $region3
  $region8: #{tpu_custom_call.1} parent=0 // loop_exit
    _

</llo_original>
